<compile_context>
chip_gen: v7x
topology: tpu7x:2x2x1
jax: 0.10.0
libtpu: 0.0.40
codegen_flags: <defaults>
</compile_context>

<pallas_src>
from functools import partial

import jax
import jax.numpy as jnp
from jax.experimental import pallas as pl
from jax.experimental.pallas import tpu as pltpu


def _round_up(x, m):
    return ((x + m - 1) // m) * m


# ----------------------------------------------------------------------------
# Kernel 1: XW = H @ W_fused   (layer-0 input projection, grid over node-row tiles)
# ----------------------------------------------------------------------------
def _project_kernel(h_ref, w_ref, o_ref):
    o_ref[...] = jnp.dot(
        h_ref[...], w_ref[...], preferred_element_type=jnp.float32
    ).astype(o_ref.dtype)


def project(h, w, *, node_tile):
    """h: (n_pad, d_in_pad) bf16, w: (d_in_pad, d_out_pad) bf16 -> (n_pad, d_out_pad) bf16."""
    n_pad, d_in = h.shape
    d_out = w.shape[1]
    grid = (n_pad // node_tile,)
    return pl.pallas_call(
        _project_kernel,
        out_shape=jax.ShapeDtypeStruct((n_pad, d_out), jnp.bfloat16),
        grid_spec=pltpu.PrefetchScalarGridSpec(
            num_scalar_prefetch=0,
            grid=grid,
            in_specs=[
                pl.BlockSpec((node_tile, d_in), lambda i: (i, 0)),
                pl.BlockSpec((d_in, d_out), lambda i: (0, 0)),
            ],
            out_specs=pl.BlockSpec((node_tile, d_out), lambda i: (i, 0)),
        ),
        compiler_params=pltpu.CompilerParams(dimension_semantics=("parallel",)),
    )(h, w)


# ----------------------------------------------------------------------------
# Kernel 2 (intermediate layers, fused):
#   acc = A @ XW  (over k tiles);  finalize: XW_next = relu(acc + b) @ W_next
# ----------------------------------------------------------------------------
def _agg_proj_kernel(adj_ref, xw_ref, b_ref, wn_ref, o_ref, acc_ref):
    k = pl.program_id(1)

    @pl.when(k == 0)
    def _():
        acc_ref[...] = jnp.zeros_like(acc_ref)

    acc_ref[...] += jnp.dot(
        adj_ref[...], xw_ref[...], preferred_element_type=jnp.float32
    )

    @pl.when(k == pl.num_programs(1) - 1)
    def _():
        h = jnp.maximum(acc_ref[...] + b_ref[...], 0.0).astype(jnp.bfloat16)
        o_ref[...] = jnp.dot(
            h, wn_ref[...], preferred_element_type=jnp.float32
        ).astype(o_ref.dtype)


def aggregate_project(adj, xw, b, w_next, *, node_tile):
    """adj: (n_pad, n_pad) bf16, xw: (n_pad, d) bf16, b: (1, d) f32, w_next: (d, d_next) bf16."""
    n_pad = adj.shape[0]
    d = xw.shape[1]
    d_next = w_next.shape[1]
    grid = (n_pad // node_tile, n_pad // node_tile)
    return pl.pallas_call(
        _agg_proj_kernel,
        out_shape=jax.ShapeDtypeStruct((n_pad, d_next), jnp.bfloat16),
        grid_spec=pltpu.PrefetchScalarGridSpec(
            num_scalar_prefetch=0,
            grid=grid,
            in_specs=[
                pl.BlockSpec((node_tile, node_tile), lambda i, k: (i, k)),  # adj tile
                pl.BlockSpec((node_tile, d), lambda i, k: (k, 0)),          # XW k-tile
                pl.BlockSpec((1, d), lambda i, k: (0, 0)),                  # fused bias
                pl.BlockSpec((d, d_next), lambda i, k: (0, 0)),             # next-layer W
            ],
            out_specs=pl.BlockSpec((node_tile, d_next), lambda i, k: (i, 0)),
            scratch_shapes=[pltpu.VMEM((node_tile, d), jnp.float32)],
        ),
        compiler_params=pltpu.CompilerParams(
            dimension_semantics=("parallel", "arbitrary")
        ),
    )(adj, xw, b, w_next)


# ----------------------------------------------------------------------------
# Kernel 3 (final layer): out = A @ XW + b   (no activation, f32 output)
# ----------------------------------------------------------------------------
def _agg_final_kernel(adj_ref, xw_ref, b_ref, o_ref, acc_ref):
    k = pl.program_id(1)

    @pl.when(k == 0)
    def _():
        acc_ref[...] = jnp.zeros_like(acc_ref)

    acc_ref[...] += jnp.dot(
        adj_ref[...], xw_ref[...], preferred_element_type=jnp.float32
    )

    @pl.when(k == pl.num_programs(1) - 1)
    def _():
        o_ref[...] = (acc_ref[...] + b_ref[...]).astype(o_ref.dtype)


def aggregate_final(adj, xw, b, *, node_tile):
    n_pad = adj.shape[0]
    d = xw.shape[1]
    grid = (n_pad // node_tile, n_pad // node_tile)
    return pl.pallas_call(
        _agg_final_kernel,
        out_shape=jax.ShapeDtypeStruct((n_pad, d), jnp.float32),
        grid_spec=pltpu.PrefetchScalarGridSpec(
            num_scalar_prefetch=0,
            grid=grid,
            in_specs=[
                pl.BlockSpec((node_tile, node_tile), lambda i, k: (i, k)),
                pl.BlockSpec((node_tile, d), lambda i, k: (k, 0)),
                pl.BlockSpec((1, d), lambda i, k: (0, 0)),
            ],
            out_specs=pl.BlockSpec((node_tile, d), lambda i, k: (i, 0)),
            scratch_shapes=[pltpu.VMEM((node_tile, d), jnp.float32)],
        ),
        compiler_params=pltpu.CompilerParams(
            dimension_semantics=("parallel", "arbitrary")
        ),
    )(adj, xw, b)


# ----------------------------------------------------------------------------
# Fused (pipe_s || pipe_p) GCN stack
# ----------------------------------------------------------------------------
def fused_gcn_forward(fused_layers, x_cat, adj_bf16, *, node_tile):
    """x_cat: (n_pad, in_pad0) bf16, adj_bf16: (n_pad, n_pad) bf16.

    Returns (n_pad, out_pad) f32 with pipe_s outputs in cols [0:c] and pipe_p in
    cols [c:2c].
    """
    xw = project(x_cat, fused_layers[0]["w"], node_tile=node_tile)
    for l in range(len(fused_layers) - 1):
        xw = aggregate_project(
            adj_bf16,
            xw,
            fused_layers[l]["b"],
            fused_layers[l + 1]["w"],
            node_tile=node_tile,
        )
    return aggregate_final(adj_bf16, xw, fused_layers[-1]["b"], node_tile=node_tile)


# ----------------------------------------------------------------------------
# Parameters: per-pipe GCN params + block-diagonal, lane-padded fused packing
# ----------------------------------------------------------------------------
def init_gcn_params(key, in_dim, hid_dim, out_dim, n_layers):
    dims = [in_dim] + [hid_dim] * (n_layers - 1) + [out_dim]
    layers = []
    for i in range(n_layers):
        key, kw = jax.random.split(key)
        fan_in, fan_out = dims[i], dims[i + 1]
        scale = jnp.sqrt(2.0 / (fan_in + fan_out)).astype(jnp.float32)
        w = scale * jax.random.normal(kw, (fan_in, fan_out), dtype=jnp.float32)
        b = jnp.zeros((fan_out,), dtype=jnp.float32)
        layers.append({"w": w, "b": b})
    return layers


def pack_fused_layers(pipe_s, pipe_p, in_dim):
    """Pack two identical-shape GCN stacks into one block-diagonal, 128-lane-padded stack."""
    fused = []
    prev_in_fused = _round_up(2 * in_dim, 128)  # layer-0 input is [xs | xp], lane-padded
    for ls, lp in zip(pipe_s, pipe_p):
        d_in, d_out = ls["w"].shape
        out_pad = _round_up(2 * d_out, 128)
        w = jnp.zeros((prev_in_fused, out_pad), jnp.float32)
        w = w.at[0:d_in, 0:d_out].set(ls["w"])
        w = w.at[d_in : 2 * d_in, d_out : 2 * d_out].set(lp["w"])
        b = jnp.zeros((1, out_pad), jnp.float32)
        b = b.at[0, 0:d_out].set(ls["b"])
        b = b.at[0, d_out : 2 * d_out].set(lp["b"])
        fused.append({"w": w.astype(jnp.bfloat16), "b": b})
        prev_in_fused = out_pad
    return fused


def init_encoder_params(key, ft_size, hid_units, common_dim, encolayer):
    ks, kp = jax.random.split(key)
    pipe_s = init_gcn_params(ks, ft_size, hid_units, common_dim, encolayer)
    pipe_p = init_gcn_params(kp, ft_size, hid_units, common_dim, encolayer)
    return {
        "pipe_s": pipe_s,  # kept (f32) for reference checks
        "pipe_p": pipe_p,
        "fused": pack_fused_layers(pipe_s, pipe_p, ft_size),
        "enc_mask_token": jnp.zeros((1, ft_size), jnp.float32),  # nn.Parameter(zeros)
        "common_dim": common_dim,
    }


# ----------------------------------------------------------------------------
# GNNEncoder forward (random remask + fused two-pipe GCN)
# ----------------------------------------------------------------------------
def random_remask(x, key, mask_token, remask_rate=0.5):
    # Matches torch: rep[remask_nodes] = 0 ; rep[remask_nodes] += mask_token
    n = x.shape[0]
    perm = jax.random.permutation(key, n)
    num_remask = int(remask_rate * n)
    remask_nodes = perm[:num_remask]
    keep = jnp.ones((n,), jnp.float32).at[remask_nodes].set(0.0)
    return x * keep[:, None] + (1.0 - keep)[:, None] * mask_token


def gnn_encoder_forward(params, x, adj, key, mask_rate):
    n, _ = x.shape
    node_tile = min(512, _round_up(n, 128))
    n_pad = _round_up(n, node_tile)

    if mask_rate == 0:
        xs, xp = x, x
    else:
        ks, kp = jax.random.split(key)
        xs = random_remask(x, ks, params["enc_mask_token"], mask_rate)
        xp = random_remask(x, kp, params["enc_mask_token"], mask_rate)
    # TODO(synk): the remask (tiny O(n*ft) elementwise) could be scalar-prefetched and
    #             fused into the first project kernel; left in XLA for simplicity.

    x_cat = jnp.concatenate([xs, xp], axis=1)
    in_pad0 = params["fused"][0]["w"].shape[0]
    x_cat = jnp.pad(
        x_cat, ((0, n_pad - n), (0, in_pad0 - x_cat.shape[1]))
    ).astype(jnp.bfloat16)
    adj_p = jnp.pad(adj, ((0, n_pad - n), (0, n_pad - n))).astype(jnp.bfloat16)

    h = fused_gcn_forward(params["fused"], x_cat, adj_p, node_tile=node_tile)

    c = params["common_dim"]
    common = h[:n, 0:c]
    private = h[:n, c : 2 * c]
    return (common, private), 0.0


# ----------------------------------------------------------------------------
# GNNDAE.forward : per-view encoder, mask_rate = 0.5
# ----------------------------------------------------------------------------
def init_gnndae_params(key, *, num_view, ft_size, hid_units, common_dim, encolayer):
    encoders = []
    key, k0 = jax.random.split(key)
    encoders.append(init_encoder_params(k0, ft_size, hid_units, common_dim, encolayer))
    ft_small = ft_size // (num_view - 1)  # args.ft_size //= (num_view - 1)
    for _ in range(num_view - 1):
        key, ki = jax.random.split(key)
        encoders.append(
            init_encoder_params(ki, ft_small, hid_units, common_dim, encolayer)
        )
    return {"encoders": encoders, "ft_sizes": [ft_size] + [ft_small] * (num_view - 1)}


def gnndae_forward(params, x_list, adj_list, key, mask_rate=0.5):
    common, private = [], []
    loss = 0.0
    for i, (x, adj) in enumerate(zip(x_list, adj_list)):
        key, ki = jax.random.split(key)
        (c, p), view_loss = gnn_encoder_forward(
            params["encoders"][i], x, adj, ki, mask_rate
        )
        common.append(c)
        private.append(p)
        loss += view_loss
    return common, private, loss


# ----------------------------------------------------------------------------
# Pure-JAX f32 reference (one pipe) for a correctness check at mask_rate=0
# ----------------------------------------------------------------------------
def _gcn_ref(layers, x, adj):
    h = x
    for i, lyr in enumerate(layers):
        h = adj @ (h @ lyr["w"]) + lyr["b"]
        if i < len(layers) - 1:
            h = jnp.maximum(h, 0.0)
    return h


def _make_norm_adj(key, n):
    a = jax.random.uniform(key, (n, n), dtype=jnp.float32)
    a = (a > 0.8).astype(jnp.float32)
    a = jnp.maximum(a, a.T) + jnp.eye(n, dtype=jnp.float32)
    deg = jnp.sum(a, axis=1, keepdims=True)
    return a / deg  # row-normalized adjacency


# ----------------------------------------------------------------------------
# Example / smoke test
# ----------------------------------------------------------------------------
if __name__ == "__main__":
    num_view = 3
    nodes = 64
    ft_size = 32        # view 0; views 1..2 get ft_size // (num_view-1) = 16
    hid_units = 32
    common_dim = 16
    encolayer = 2

    root = jax.random.PRNGKey(0)
    k_param, k_data, k_run = jax.random.split(root, 3)

    params = init_gnndae_params(
        k_param,
        num_view=num_view,
        ft_size=ft_size,
        hid_units=hid_units,
        common_dim=common_dim,
        encolayer=encolayer,
    )

    x_list, adj_list = [], []
    for fdim in params["ft_sizes"]:
        k_data, kx, ka = jax.random.split(k_data, 3)
        x_list.append(jax.random.normal(kx, (nodes, fdim), dtype=jnp.float32))
        adj_list.append(_make_norm_adj(ka, nodes))

    # Correctness check (mask_rate=0, deterministic) vs pure-JAX f32 reference (bf16 tol).
    (c0, p0), _ = gnn_encoder_forward(
        params["encoders"][0], x_list[0], adj_list[0], jax.random.PRNGKey(1), mask_rate=0
    )
    ref_c = _gcn_ref(params["encoders"][0]["pipe_s"], x_list[0], adj_list[0])
    ref_p = _gcn_ref(params["encoders"][0]["pipe_p"], x_list[0], adj_list[0])
    for got, ref in ((c0, ref_c), (p0, ref_p)):
        rel = float(jnp.max(jnp.abs(got - ref)) / (jnp.max(jnp.abs(ref)) + 1e-6))
        assert rel < 0.08, f"kernel mismatch vs reference, rel max err = {rel}"

    # Full GNNDAE.forward with mask_rate=0.5 (as in the torch module).
    common, private, loss = gnndae_forward(
        params, x_list, adj_list, k_run, mask_rate=0.5
    )
    for c, p in zip(common, private):
        jax.block_until_ready(c)
        jax.block_until_ready(p)
        assert c.shape == (nodes, common_dim)
        assert p.shape == (nodes, common_dim)

    print("KERNEL_OK")
</pallas_src>

<mosaic_0001>
module attributes {stable_mosaic.version = 11 : i64} {
  func.func @_project_kernel(%arg0: i32, %arg1: memref<128x128xbf16, #tpu.memory_space<vmem>>, %arg2: memref<128x128xbf16, #tpu.memory_space<vmem>>, %arg3: memref<128x128xbf16, #tpu.memory_space<vmem>>) attributes {dimension_semantics = [#tpu.dimension_semantics<parallel>], iteration_bounds = array<i64: 1>, scalar_prefetch = 0 : i64, scratch_operands = 0 : i64, tpu.core_type = #tpu.core_type<tc>, window_params = [{transform_indices = @transform_0, window_bounds = array<i64: 128, 128>}, {pipeline_mode = #tpu.pipeline_mode<synchronous>, transform_indices = @transform_1, window_bounds = array<i64: 128, 128>}, {transform_indices = @transform_2, window_bounds = array<i64: 128, 128>}]} {
    %c0 = arith.constant 0 : index
    %c0_0 = arith.constant 0 : index
    %0 = vector.load %arg1[%c0, %c0_0] : memref<128x128xbf16, #tpu.memory_space<vmem>>, vector<128x128xbf16>
    %c0_1 = arith.constant 0 : index
    %c0_2 = arith.constant 0 : index
    %1 = vector.load %arg2[%c0_1, %c0_2] : memref<128x128xbf16, #tpu.memory_space<vmem>>, vector<128x128xbf16>
    %cst = arith.constant dense<0.000000e+00> : vector<128x128xf32>
    %2 = tpu.matmul %0, %1, %cst {dimension_numbers = #tpu.dot_dimension_numbers<[1], [0], [0], [1], [0, 0, 1, 1], [], []>} : vector<128x128xbf16>, vector<128x128xbf16>, vector<128x128xf32> -> vector<128x128xf32>
    %3 = arith.truncf %2 : vector<128x128xf32> to vector<128x128xbf16>
    %c0_3 = arith.constant 0 : index
    %c0_4 = arith.constant 0 : index
    %4 = vector.load %arg3[%c0_3, %c0_4] : memref<128x128xbf16, #tpu.memory_space<vmem>>, vector<128x128xbf16>
    tpu.vector_store %arg3[%c0_3, %c0_4], %3 {strides = array<i32>} : memref<128x128xbf16, #tpu.memory_space<vmem>>, vector<128x128xbf16>,
    return
  }
  func.func @transform_0(%arg0: i32) -> (i32, i32) {
    %c0_i32 = arith.constant 0 : i32
    %c0_i32_0 = arith.constant 0 : i32
    return %arg0, %c0_i32 : i32, i32
  }
  func.func @transform_1(%arg0: i32) -> (i32, i32) {
    %c0_i32 = arith.constant 0 : i32
    %c0_i32_0 = arith.constant 0 : i32
    %c0_i32_1 = arith.constant 0 : i32
    return %c0_i32, %c0_i32_0 : i32, i32
  }
  func.func @transform_2(%arg0: i32) -> (i32, i32) {
    %c0_i32 = arith.constant 0 : i32
    %c0_i32_0 = arith.constant 0 : i32
    return %arg0, %c0_i32 : i32, i32
  }
}

</mosaic_0001>

<llo_original>
// kernel: tpu_custom_call.1
$region0: #{tpu_custom_call.1}
  #allocation0 [shape = 'u32[]', space=smem, size = 0x4, offset = 0x4, fixed_abs, tag = 'smem constant byte address 0x4 - core index']
  #allocation1 [shape = 'u32[144,128]{1,0:T(1,128)}', space=vmem, size = 0x12000, scoped, tag = 'internal scratch']
  %s0 = inlined_call_operand.hbm [shape: bf16[128,128], index: 0, kind: input, shape index: {}]
  %s1 = inlined_call_operand.hbm [shape: bf16[128,128], index: 1, kind: input, shape index: {}]
  %s2 = inlined_call_operand.hbm [shape: bf16[128,128], index: 2, kind: output, shape index: {}]
  %s3 = sld [smem:[#allocation0]]
  $region26: #{tpu_custom_call.1} parent=0
    _
  %s5 = ssub.s32 1, %s3
  %s6 = scalar_select 0, %s5, %s3
  $region1: #{tpu_custom_call.1} parent=0
    #allocation2 [shape = 'u8[32768]{0}', space=vmem, size = 0x8000, scoped, tag = 'input window, operand 0, single buffered']
    #allocation3 [shape = 's32[1]{0}', space=sflag, size = 0x4, scoped, tag = 'scoped memory for tpu_custom_call.1']
    #allocation4 [shape = 's32[1]{0}', space=sflag, size = 0x4, scoped, tag = 'scoped memory for tpu_custom_call.1']
    #allocation5 [shape = 'u8[32768]{0}', space=vmem, size = 0x8000, scoped, tag = 'input window, operand 1, single buffered']
    #allocation6 [shape = 's32[1]{0}', space=sflag, size = 0x4, scoped, tag = 'scoped memory for tpu_custom_call.1']
    #allocation7 [shape = 'u8[32768]{0}', space=vmem, size = 0x8000, scoped, tag = 'output window, operand 0, single buffered']
    %7 = vsyncpa [#allocation3], 0
    %8 = vsyncpa [#allocation6], 0
    %9 = vsyncpa [#allocation4], 0
    // Predicated region
    $region2: #{tpu_custom_call.1} parent=1 // pred_check
      _
    $region3: #{tpu_custom_call.1} parent=1 // pred_check_branch
      %11 = sbr.rel (0) target = $region5
    $region4: #{tpu_custom_call.1} parent=1 // pred_region
      %s13 = ssub.s32 1024, 1024
      %14 = vsyncadd [#allocation3], %s13
      %s15 = sshll.u32 [#allocation2], 4
      %s16 = int_to_ptr.vmem [resolvable:$true] %s15
      %21 = dma.hbm_to_vmem [thread:$0]  %s0, 1024, %s16, [#allocation3], 64, 64, 4
    $region5: #{tpu_custom_call.1} parent=1 // pred_fallthru
      _
    // Predicated region
    $region6: #{tpu_custom_call.1} parent=1 // pred_check
      _
    $region7: #{tpu_custom_call.1} parent=1 // pred_check_branch
      %23 = sbr.rel (0) target = $region9
    $region8: #{tpu_custom_call.1} parent=1 // pred_region
      %s25 = ssub.s32 1024, 1024
      %26 = vsyncadd [#allocation6], %s25
      %s27 = sshll.u32 [#allocation5], 4
      %s28 = int_to_ptr.vmem [resolvable:$true] %s27
      %33 = dma.hbm_to_vmem [thread:$0]  %s1, 1024, %s28, [#allocation6], 64, 64, 4
    $region9: #{tpu_custom_call.1} parent=1 // pred_fallthru
      _
    // Predicated region
    $region10: #{tpu_custom_call.1} parent=1 // pred_check
      _
    $region11: #{tpu_custom_call.1} parent=1 // pred_check_branch
      %35 = sbr.rel (0) target = $region13
    $region12: #{tpu_custom_call.1} parent=1 // pred_region
      %36 = dma.done [#allocation3], 1024
    $region13: #{tpu_custom_call.1} parent=1 // pred_fallthru
      _
    // Predicated region
    $region14: #{tpu_custom_call.1} parent=1 // pred_check
      _
    $region15: #{tpu_custom_call.1} parent=1 // pred_check_branch
      %38 = sbr.rel (0) target = $region17
    $region16: #{tpu_custom_call.1} parent=1 // pred_region
      %39 = dma.done [#allocation6], 1024
    $region17: #{tpu_custom_call.1} parent=1 // pred_fallthru
      _
    %v41 = vld [vmem:[#allocation2] sm:$0xf]
    %v42 = vld [vmem:[#allocation2 + $0x4] sm:$0xf]
    %v43 = vld [vmem:[#allocation2 + $0x8] sm:$0xf]
    %v44 = vld [vmem:[#allocation2 + $0xc] sm:$0xf]
    %v45 = vld [vmem:[#allocation2 + $0x10] sm:$0xf]
    %v46 = vld [vmem:[#allocation2 + $0x14] sm:$0xf]
    %v47 = vld [vmem:[#allocation2 + $0x18] sm:$0xf]
    %v48 = vld [vmem:[#allocation2 + $0x1c] sm:$0xf]
    %v49 = vld [vmem:[#allocation2 + $0x20] sm:$0xf]
    %v50 = vld [vmem:[#allocation2 + $0x24] sm:$0xf]
    %v51 = vld [vmem:[#allocation2 + $0x28] sm:$0xf]
    %v52 = vld [vmem:[#allocation2 + $0x2c] sm:$0xf]
    %v53 = vld [vmem:[#allocation2 + $0x30] sm:$0xf]
    %v54 = vld [vmem:[#allocation2 + $0x34] sm:$0xf]
    %v55 = vld [vmem:[#allocation2 + $0x38] sm:$0xf]
    %v56 = vld [vmem:[#allocation2 + $0x3c] sm:$0xf]
    %v57 = vld [vmem:[#allocation5] sm:$0xf]
    %v58 = vld [vmem:[#allocation5 + $0x4] sm:$0xf]
    %v59 = vld [vmem:[#allocation5 + $0x8] sm:$0xf]
    %v60 = vld [vmem:[#allocation5 + $0xc] sm:$0xf]
    %v61 = vld [vmem:[#allocation5 + $0x10] sm:$0xf]
    %v62 = vld [vmem:[#allocation5 + $0x14] sm:$0xf]
    %v63 = vld [vmem:[#allocation5 + $0x18] sm:$0xf]
    %v64 = vld [vmem:[#allocation5 + $0x1c] sm:$0xf]
    %v65 = vld [vmem:[#allocation5 + $0x20] sm:$0xf]
    %v66 = vld [vmem:[#allocation5 + $0x24] sm:$0xf]
    %v67 = vld [vmem:[#allocation5 + $0x28] sm:$0xf]
    %v68 = vld [vmem:[#allocation5 + $0x2c] sm:$0xf]
    %v69 = vld [vmem:[#allocation5 + $0x30] sm:$0xf]
    %v70 = vld [vmem:[#allocation5 + $0x34] sm:$0xf]
    %v71 = vld [vmem:[#allocation5 + $0x38] sm:$0xf]
    %v72 = vld [vmem:[#allocation5 + $0x3c] sm:$0xf]
    %v89 = vunpack.c.l.b16 %v41
    %v90 = vunpack.c.l.b16 %v42
    %v91 = vunpack.c.l.b16 %v43
    %v92 = vunpack.c.l.b16 %v44
    %v93 = vunpack.c.l.b16 %v45
    %v94 = vunpack.c.l.b16 %v46
    %v95 = vunpack.c.l.b16 %v47
    %v96 = vunpack.c.l.b16 %v48
    %v97 = vunpack.c.l.b16 %v49
    %v98 = vunpack.c.l.b16 %v50
    %v99 = vunpack.c.l.b16 %v51
    %v100 = vunpack.c.l.b16 %v52
    %v101 = vunpack.c.l.b16 %v53
    %v102 = vunpack.c.l.b16 %v54
    %v103 = vunpack.c.l.b16 %v55
    %v104 = vunpack.c.l.b16 %v56
    %v105 = vpack.c.b16 %v90, %v89
    %v106 = vpack.c.b16 %v92, %v91
    %v107 = vpack.c.b16 %v94, %v93
    %v108 = vpack.c.b16 %v96, %v95
    %v109 = vpack.c.b16 %v98, %v97
    %v110 = vpack.c.b16 %v100, %v99
    %v111 = vpack.c.b16 %v102, %v101
    %v112 = vpack.c.b16 %v104, %v103
    %v137 = vunpack.c.l.b16 %v57
    %v138 = vunpack.c.l.b16 %v58
    %v139 = vunpack.c.l.b16 %v59
    %v140 = vunpack.c.l.b16 %v60
    %v141 = vunpack.c.l.b16 %v61
    %v142 = vunpack.c.l.b16 %v62
    %v143 = vunpack.c.l.b16 %v63
    %v144 = vunpack.c.l.b16 %v64
    %v145 = vunpack.c.l.b16 %v65
    %v146 = vunpack.c.l.b16 %v66
    %v147 = vunpack.c.l.b16 %v67
    %v148 = vunpack.c.l.b16 %v68
    %v149 = vunpack.c.l.b16 %v69
    %v150 = vunpack.c.l.b16 %v70
    %v151 = vunpack.c.l.b16 %v71
    %v152 = vunpack.c.l.b16 %v72
    %v153 = vpack.c.b16 %v138, %v137
    %v154 = vpack.c.b16 %v140, %v139
    %v155 = vpack.c.b16 %v142, %v141
    %v156 = vpack.c.b16 %v144, %v143
    %v157 = vpack.c.b16 %v146, %v145
    %v158 = vpack.c.b16 %v148, %v147
    %v159 = vpack.c.b16 %v150, %v149
    %v160 = vpack.c.b16 %v152, %v151
    %169 = vmatprep.subr.bf16.mxu0 0
    %170 = vmatpush1.bf16.msra.mxu0 %v153
    %171 = vmatprep.subr.bf16.mxu0 0
    %172 = vmatpush1.bf16.msra.mxu0 %v154
    %173 = vmatprep.subr.bf16.mxu0 0
    %174 = vmatpush1.bf16.msra.mxu0 %v155
    %175 = vmatprep.subr.bf16.mxu0 0
    %176 = vmatpush1.bf16.msra.mxu0 %v156
    %177 = vmatprep.subr.bf16.mxu0 0
    %178 = vmatpush1.bf16.msra.mxu0 %v157
    %179 = vmatprep.subr.bf16.mxu0 0
    %180 = vmatpush1.bf16.msra.mxu0 %v158
    %181 = vmatprep.subr.bf16.mxu0 0
    %182 = vmatpush1.bf16.msra.mxu0 %v159
    %183 = vmatprep.subr.bf16.mxu0 0
    %184 = vmatpush1.bf16.msra.mxu0 %v160
    %185 = vmatprep.subr.bf16.mxu0 0
    %186 = vmatpush1.bf16.msra.mxu0 0
    %187 = vmatprep.subr.bf16.mxu0 0
    %188 = vmatpush1.bf16.msra.mxu0 0
    %189 = vmatprep.subr.bf16.mxu0 0
    %190 = vmatpush1.bf16.msra.mxu0 0
    %191 = vmatprep.subr.bf16.mxu0 0
    %192 = vmatpush1.bf16.msra.mxu0 0
    %193 = vmatprep.subr.bf16.mxu0 0
    %194 = vmatpush1.bf16.msra.mxu0 0
    %195 = vmatprep.subr.bf16.mxu0 0
    %196 = vmatpush1.bf16.msra.mxu0 0
    %197 = vmatprep.subr.bf16.mxu0 0
    %198 = vmatpush1.bf16.msra.mxu0 0
    %199 = vmatprep.subr.bf16.mxu0 0
    %200 = vmatpush1.bf16.msra.mxu0 0
    %201 = vmatprep.mubr.bf16.mxu0 0
    %202 = vmatmul.mubr.bf16.gmra.mrb[0].mxu0 %v105
    %v203 = vpop.f32.mrb[0].mxu0
    %v204 = vadd.f32 0.0, %v203
    %v205 = vpop.f32.mrb[0].mxu0
    %v206 = vpop.f32.mrb[0].mxu0
    %v207 = vadd.f32 0.0, %v206
    %v208 = vpop.f32.mrb[0].mxu0
    %209 = vmatprep.mubr.bf16.mxu0 0
    %210 = vmatmul.mubr.bf16.gmra.mrb[0].mxu0 %v106
    %v211 = vpop.f32.mrb[0].mxu0
    %v212 = vadd.f32 0.0, %v211
    %v213 = vpop.f32.mrb[0].mxu0
    %v214 = vpop.f32.mrb[0].mxu0
    %v215 = vadd.f32 0.0, %v214
    %v216 = vpop.f32.mrb[0].mxu0
    %217 = vmatprep.mubr.bf16.mxu0 0
    %218 = vmatmul.mubr.bf16.gmra.mrb[0].mxu0 %v107
    %v219 = vpop.f32.mrb[0].mxu0
    %v220 = vadd.f32 0.0, %v219
    %v221 = vpop.f32.mrb[0].mxu0
    %v222 = vpop.f32.mrb[0].mxu0
    %v223 = vadd.f32 0.0, %v222
    %v224 = vpop.f32.mrb[0].mxu0
    %225 = vmatprep.mubr.bf16.mxu0 0
    %226 = vmatmul.mubr.bf16.gmra.mrb[0].mxu0 %v108
    %v227 = vpop.f32.mrb[0].mxu0
    %v228 = vadd.f32 0.0, %v227
    %v229 = vpop.f32.mrb[0].mxu0
    %v230 = vpop.f32.mrb[0].mxu0
    %v231 = vadd.f32 0.0, %v230
    %v232 = vpop.f32.mrb[0].mxu0
    %233 = vmatprep.mubr.bf16.mxu0 0
    %234 = vmatmul.mubr.bf16.gmra.mrb[0].mxu0 %v109
    %v235 = vpop.f32.mrb[0].mxu0
    %v236 = vadd.f32 0.0, %v235
    %v237 = vpop.f32.mrb[0].mxu0
    %v238 = vpop.f32.mrb[0].mxu0
    %v239 = vadd.f32 0.0, %v238
    %v240 = vpop.f32.mrb[0].mxu0
    %241 = vmatprep.mubr.bf16.mxu0 0
    %242 = vmatmul.mubr.bf16.gmra.mrb[0].mxu0 %v110
    %v243 = vpop.f32.mrb[0].mxu0
    %v244 = vadd.f32 0.0, %v243
    %v245 = vpop.f32.mrb[0].mxu0
    %v246 = vpop.f32.mrb[0].mxu0
    %v247 = vadd.f32 0.0, %v246
    %v248 = vpop.f32.mrb[0].mxu0
    %249 = vmatprep.mubr.bf16.mxu0 0
    %250 = vmatmul.mubr.bf16.gmra.mrb[0].mxu0 %v111
    %v251 = vpop.f32.mrb[0].mxu0
    %v252 = vadd.f32 0.0, %v251
    %v253 = vpop.f32.mrb[0].mxu0
    %v254 = vpop.f32.mrb[0].mxu0
    %v255 = vadd.f32 0.0, %v254
    %v256 = vpop.f32.mrb[0].mxu0
    %257 = vmatprep.mubr.bf16.mxu0 0
    %258 = vmatmul.mubr.bf16.gmra.mrb[0].mxu0 %v112
    %v259 = vpop.f32.mrb[0].mxu0
    %v260 = vadd.f32 0.0, %v259
    %v261 = vpop.f32.mrb[0].mxu0
    %v262 = vpop.f32.mrb[0].mxu0
    %v263 = vadd.f32 0.0, %v262
    %v264 = vpop.f32.mrb[0].mxu0
    %265 = vdwg.mxu0
    %v266 = vpack.c.bf16 %v207, %v204
    %v267 = vpack.c.bf16 %v215, %v212
    %v268 = vpack.c.bf16 %v223, %v220
    %v269 = vpack.c.bf16 %v231, %v228
    %v270 = vpack.c.bf16 %v239, %v236
    %v271 = vpack.c.bf16 %v247, %v244
    %v272 = vpack.c.bf16 %v255, %v252
    %v273 = vpack.c.bf16 %v263, %v260
    %v282 = vunpack.c.l.b16 %v266
    %v283 = vunpack.c.h.b16 %v266
    %v284 = vunpack.c.l.b16 %v267
    %v285 = vunpack.c.h.b16 %v267
    %v286 = vunpack.c.l.b16 %v268
    %v287 = vunpack.c.h.b16 %v268
    %v288 = vunpack.c.l.b16 %v269
    %v289 = vunpack.c.h.b16 %v269
    %v290 = vunpack.c.l.b16 %v270
    %v291 = vunpack.c.h.b16 %v270
    %v292 = vunpack.c.l.b16 %v271
    %v293 = vunpack.c.h.b16 %v271
    %v294 = vunpack.c.l.b16 %v272
    %v295 = vunpack.c.h.b16 %v272
    %v296 = vunpack.c.l.b16 %v273
    %v297 = vunpack.c.h.b16 %v273
    %v298 = vpack.c.b16 %v282, %v282
    %v299 = vpack.c.b16 %v283, %v283
    %v300 = vpack.c.b16 %v284, %v284
    %v301 = vpack.c.b16 %v285, %v285
    %v302 = vpack.c.b16 %v286, %v286
    %v303 = vpack.c.b16 %v287, %v287
    %v304 = vpack.c.b16 %v288, %v288
    %v305 = vpack.c.b16 %v289, %v289
    %v306 = vpack.c.b16 %v290, %v290
    %v307 = vpack.c.b16 %v291, %v291
    %v308 = vpack.c.b16 %v292, %v292
    %v309 = vpack.c.b16 %v293, %v293
    %v310 = vpack.c.b16 %v294, %v294
    %v311 = vpack.c.b16 %v295, %v295
    %v312 = vpack.c.b16 %v296, %v296
    %v313 = vpack.c.b16 %v297, %v297
    %330 = vst [vmem:[#allocation7] sm:$0xf] %v298
    %331 = vst [vmem:[#allocation7 + $0x4] sm:$0xf] %v299
    %332 = vst [vmem:[#allocation7 + $0x8] sm:$0xf] %v300
    %333 = vst [vmem:[#allocation7 + $0xc] sm:$0xf] %v301
    %334 = vst [vmem:[#allocation7 + $0x10] sm:$0xf] %v302
    %335 = vst [vmem:[#allocation7 + $0x14] sm:$0xf] %v303
    %336 = vst [vmem:[#allocation7 + $0x18] sm:$0xf] %v304
    %337 = vst [vmem:[#allocation7 + $0x1c] sm:$0xf] %v305
    %338 = vst [vmem:[#allocation7 + $0x20] sm:$0xf] %v306
    %339 = vst [vmem:[#allocation7 + $0x24] sm:$0xf] %v307
    %340 = vst [vmem:[#allocation7 + $0x28] sm:$0xf] %v308
    %341 = vst [vmem:[#allocation7 + $0x2c] sm:$0xf] %v309
    %342 = vst [vmem:[#allocation7 + $0x30] sm:$0xf] %v310
    %343 = vst [vmem:[#allocation7 + $0x34] sm:$0xf] %v311
    %344 = vst [vmem:[#allocation7 + $0x38] sm:$0xf] %v312
    %345 = vst [vmem:[#allocation7 + $0x3c] sm:$0xf] %v313
    // Predicated region
    $region18: #{tpu_custom_call.1} parent=1 // pred_check
      _
    $region19: #{tpu_custom_call.1} parent=1 // pred_check_branch
      %347 = sbr.rel (0) target = $region21
    $region20: #{tpu_custom_call.1} parent=1 // pred_region
      %s349 = ssub.s32 1024, 1024
      %350 = vsyncadd [#allocation4], %s349
      %s351 = sshll.u32 [#allocation7], 4
      %s352 = int_to_ptr.vmem [resolvable:$true] %s351
      %357 = dma.vmem_to_hbm [thread:$0]  %s352, 1024, %s2, [#allocation4], 64, 64, 4
    $region21: #{tpu_custom_call.1} parent=1 // pred_fallthru
      _
    // Predicated region
    $region22: #{tpu_custom_call.1} parent=1 // pred_check
      _
    $region23: #{tpu_custom_call.1} parent=1 // pred_check_branch
      %359 = sbr.rel (0) target = $region25
    $region24: #{tpu_custom_call.1} parent=1 // pred_region
      %360 = dma.done [#allocation4], 1024
    $region25: #{tpu_custom_call.1} parent=1 // pred_fallthru
      _
    %361 = vsyncpa [#allocation3], 1
    %362 = vsyncpa [#allocation6], 1
    %363 = vsyncpa [#allocation4], 1

</llo_original>
